<compile_context>
chip_gen: v5e
topology: v5e:2x2
jax: 0.10.0
libtpu: 0.0.40
codegen_flags: <defaults>
</compile_context>

<pallas_src>
import functools

import jax
import jax.numpy as jnp
from jax.experimental import pallas as pl
from jax.experimental.pallas import tpu as pltpu


# ----------------------------------------------------------------------------
# helpers
# ----------------------------------------------------------------------------
def _round_up(x: int, m: int) -> int:
    return ((x + m - 1) // m) * m


def _choose_tile(dim: int, pref: int, mult: int):
    """Pick (tile, padded_dim).

    tile is a multiple of `mult` (sublane 16 / lane 128 safe for f32 and bf16).
    Small dims get a single padded block; large dims prefer an exact divisor of
    `dim` close to `pref` (no padding), otherwise fall back to `pref` plus
    padding.  A block never silently becomes a huge full-dimension slab.
    """
    if dim <= pref:
        t = _round_up(dim, mult)
        return t, t
    cand = pref
    tile = pref
    while cand >= max(mult, pref // 2):
        if dim % cand == 0:
            tile = cand
            break
        cand -= mult
    return tile, _round_up(dim, tile)


def _pad_to(x, shape):
    pads = [(0, t - s) for s, t in zip(x.shape, shape)]
    if all(p == (0, 0) for p in pads):
        return x
    return jnp.pad(x, pads)


@functools.lru_cache(maxsize=1)
def _vmem_limit() -> int:
    """VMEM budget derived from the actual chip (v7x has only 64 MiB per TC)."""
    try:
        cap = int(pltpu.get_tpu_info().vmem_capacity_bytes)
    except Exception:
        cap = 64 * 1024 * 1024
    return max(32 * 1024 * 1024, min(3 * cap // 4, 100 * 1024 * 1024))


# ----------------------------------------------------------------------------
# Kernel 1: tiled matmul + bias  (out = x @ w + b)
# ----------------------------------------------------------------------------
def _matmul_bias_kernel(x_ref, w_ref, b_ref, o_ref, acc_ref):
    @pl.when(pl.program_id(2) == 0)
    def _():
        acc_ref[...] = jnp.zeros(acc_ref.shape, acc_ref.dtype)

    # Operands arrive in bf16 (cast once at trace time) -> bf16-native MXU on
    # v6e/v7x; accumulation stays f32 in VMEM scratch.
    acc_ref[...] += jnp.dot(
        x_ref[...], w_ref[...], preferred_element_type=jnp.float32
    )

    @pl.when(pl.program_id(2) == pl.num_programs(2) - 1)
    def _():
        # Bias is kept/added in f32 (no premature downcast), then cast once.
        o_ref[...] = (acc_ref[...] + b_ref[...].astype(jnp.float32)).astype(o_ref.dtype)


def matmul_bias(x, w, b, *, out_dtype=None, tm_pref=256, tn_pref=512, tk_pref=1024):
    """x: (M, K), w: (K, N), b: (N,) f32 -> (M, N) in out_dtype (default x.dtype)."""
    M, K = x.shape
    K2, N = w.shape
    assert K == K2 and b.shape == (N,)
    out_dtype = x.dtype if out_dtype is None else out_dtype

    tm, Mp = _choose_tile(M, tm_pref, 16)     # sublane dim (bf16-safe multiple of 16)
    tn, Np = _choose_tile(N, tn_pref, 128)    # lane dim
    tk, Kp = _choose_tile(K, tk_pref, 128)    # lane dim of x / sublane dim of w

    xp = _pad_to(x, (Mp, Kp))
    wp = _pad_to(w, (Kp, Np))
    bp = _pad_to(b.astype(jnp.float32), (Np,)).reshape(1, Np)

    out = pl.pallas_call(
        _matmul_bias_kernel,
        out_shape=jax.ShapeDtypeStruct((Mp, Np), out_dtype),
        grid_spec=pltpu.PrefetchScalarGridSpec(
            num_scalar_prefetch=0,
            grid=(Mp // tm, Np // tn, Kp // tk),      # reduction (K) axis last
            in_specs=[
                pl.BlockSpec((tm, tk), lambda i, j, k: (i, k)),
                pl.BlockSpec((tk, tn), lambda i, j, k: (k, j)),
                pl.BlockSpec((1, tn), lambda i, j, k: (0, j)),
            ],
            out_specs=pl.BlockSpec((tm, tn), lambda i, j, k: (i, j)),
            scratch_shapes=[pltpu.VMEM((tm, tn), jnp.float32)],
        ),
        compiler_params=pltpu.CompilerParams(
            dimension_semantics=("parallel", "parallel", "arbitrary"),
            vmem_limit_bytes=_vmem_limit(),
        ),
    )(xp, wp, bp)

    if (Mp, Np) != (M, N):
        out = out[:M, :N]
    return out


# ----------------------------------------------------------------------------
# Kernel 2: flash attention (online softmax) over q,k,v of shape (B*H, N, hd)
# ----------------------------------------------------------------------------
def _flash_attn_kernel(q_ref, k_ref, v_ref, o_ref, m_sc, l_sc, acc_sc,
                       *, kv_len, block_kv, mask_needed):
    kv = pl.program_id(2)

    @pl.when(kv == 0)
    def _():
        m_sc[...] = jnp.full(m_sc.shape, -jnp.inf, m_sc.dtype)
        l_sc[...] = jnp.zeros(l_sc.shape, l_sc.dtype)
        acc_sc[...] = jnp.zeros(acc_sc.shape, acc_sc.dtype)

    q = q_ref[...]   # (tq, hd)   leading batch*head dim squeezed by BlockSpec
    k = k_ref[...]   # (tkv, hd)
    v = v_ref[...]   # (tkv, hd)

    # s = q @ k^T (scale already folded into the QKV projection weights).
    s = jax.lax.dot_general(
        q, k, (((1,), (1,)), ((), ())), preferred_element_type=jnp.float32
    )                                                            # (tq, tkv) f32

    if mask_needed:
        key_ids = kv * block_kv + jax.lax.broadcasted_iota(
            jnp.int32, (1, block_kv), 1)
        s = jnp.where(key_ids < kv_len, s, jnp.float32(-1e30))   # mask padded keys

    # Online softmax in f32 (v5e has no bf16 VPU/EUP).
    m_prev = m_sc[...]
    m_new = jnp.maximum(m_prev, s.max(axis=-1, keepdims=True))
    alpha = jnp.exp(m_prev - m_new)
    p = jnp.exp(s - m_new)
    l_sc[...] = alpha * l_sc[...] + p.sum(axis=-1, keepdims=True)
    acc_sc[...] = alpha * acc_sc[...] + jnp.dot(
        p.astype(v.dtype), v, preferred_element_type=jnp.float32
    )
    m_sc[...] = m_new

    @pl.when(kv == pl.num_programs(2) - 1)
    def _():
        o_ref[...] = (acc_sc[...] * pl.reciprocal(l_sc[...], approx=True)
                      ).astype(o_ref.dtype)


def flash_attention(q, k, v, *, tq_pref=256, tkv_pref=512):
    """q, k, v: (B*H, N, hd) -> (B*H, N, hd).  Large KV tiles amortize step overhead."""
    BH, N, hd = q.shape
    tq, nq_pad = _choose_tile(N, tq_pref, 16)
    tkv, nkv_pad = _choose_tile(N, tkv_pref, 16)
    n_pad = max(nq_pad, nkv_pad)

    qp = _pad_to(q, (BH, n_pad, hd))
    kp = _pad_to(k, (BH, n_pad, hd))
    vp = _pad_to(v, (BH, n_pad, hd))

    kernel = functools.partial(
        _flash_attn_kernel, kv_len=N, block_kv=tkv, mask_needed=(nkv_pad != N))

    # TODO(synk): when hd < 128 (hd=64 ViT heads), packing 2 heads per grid step
    # would double lane/MXU utilization; left as a follow-up.
    out = pl.pallas_call(
        kernel,
        out_shape=jax.ShapeDtypeStruct((BH, nq_pad, hd), q.dtype),
        grid_spec=pltpu.PrefetchScalarGridSpec(
            num_scalar_prefetch=0,
            grid=(BH, nq_pad // tq, nkv_pad // tkv),   # KV reduction axis last
            in_specs=[
                pl.BlockSpec((None, tq, hd), lambda b, qi, ki: (b, qi, 0)),
                pl.BlockSpec((None, tkv, hd), lambda b, qi, ki: (b, ki, 0)),
                pl.BlockSpec((None, tkv, hd), lambda b, qi, ki: (b, ki, 0)),
            ],
            out_specs=pl.BlockSpec((None, tq, hd), lambda b, qi, ki: (b, qi, 0)),
            scratch_shapes=[
                pltpu.VMEM((tq, 1), jnp.float32),    # running max
                pltpu.VMEM((tq, 1), jnp.float32),    # running denom
                pltpu.VMEM((tq, hd), jnp.float32),   # output accumulator
            ],
        ),
        compiler_params=pltpu.CompilerParams(
            dimension_semantics=("parallel", "parallel", "arbitrary"),
            vmem_limit_bytes=_vmem_limit(),
        ),
    )(qp, kp, vp)

    if nq_pad != N:
        out = out[:, :N, :]
    return out


# ----------------------------------------------------------------------------
# Full Attention forward (matches the PyTorch module's default config)
# ----------------------------------------------------------------------------
def attention_forward(x, w_qkv, b_qkv, w_proj, b_proj, num_heads,
                      *, compute_dtype=jnp.bfloat16):
    """x: (B, N, C); w_qkv: (C, 3C); w_proj: (C, C); biases 1-D f32.

    MXU operands and intermediates run in `compute_dtype` (bf16 by default for
    the bf16-native MXUs on v6e/v7x); softmax math and all accumulation stay f32;
    the final output is returned in x.dtype.
    """
    B, N, C = x.shape
    H = num_heads
    hd = C // H
    scale = float(hd) ** -0.5

    # Fold the softmax scale into the q-columns of Wqkv / bqkv at trace time
    # (free; exact since qk_norm=False -> q_norm is Identity).  Removes the
    # per-step VPU scaling from the flash kernel entirely.
    w_qkv_s = jnp.concatenate([w_qkv[:, :C] * scale, w_qkv[:, C:]], axis=1)
    b_qkv_s = jnp.concatenate([b_qkv[:C] * scale, b_qkv[C:]], axis=0)

    # ---- QKV projection ----
    x2 = x.reshape(B * N, C).astype(compute_dtype)
    qkv = matmul_bias(x2, w_qkv_s.astype(compute_dtype), b_qkv_s,
                      out_dtype=compute_dtype)                    # (B*N, 3C)

    # TODO(synk): the N<->H transposes below are pure HBM traffic; folding them
    # into the flash kernel's BlockSpecs requires 128-aligned head_dim column
    # blocks, which hd=64 ViT heads do not satisfy.  bf16 intermediates halve it.
    qkv = qkv.reshape(B, N, 3, H, hd).transpose(2, 0, 3, 1, 4)    # (3, B, H, N, hd)
    q = qkv[0].reshape(B * H, N, hd)
    k = qkv[1].reshape(B * H, N, hd)
    v = qkv[2].reshape(B * H, N, hd)
    # qk_norm=False in the module -> q_norm / k_norm are Identity (nothing to do).
    # TODO(synk): fused_attention branch of the PyTorch module is elided ("...") in the spec.

    # ---- scaled dot-product attention ----
    o = flash_attention(q, k, v)                                  # (B*H, N, hd)
    o = o.reshape(B, H, N, hd).transpose(0, 2, 1, 3).reshape(B * N, C)

    # ---- output projection ----
    out = matmul_bias(o, w_proj.astype(compute_dtype), b_proj, out_dtype=x.dtype)
    return out.reshape(B, N, C)


# ----------------------------------------------------------------------------
# Pure-JAX reference (same math as the PyTorch forward) for correctness check
# ----------------------------------------------------------------------------
def attention_ref(x, w_qkv, b_qkv, w_proj, b_proj, num_heads):
    B, N, C = x.shape
    H = num_heads
    hd = C // H
    qkv = x @ w_qkv + b_qkv
    qkv = qkv.reshape(B, N, 3, H, hd).transpose(2, 0, 3, 1, 4)
    q, k, v = qkv[0], qkv[1], qkv[2]
    q = q * (float(hd) ** -0.5)
    attn = q @ jnp.swapaxes(k, -2, -1)
    attn = jax.nn.softmax(attn, axis=-1)
    o = attn @ v
    o = o.transpose(0, 2, 1, 3).reshape(B, N, C)
    return o @ w_proj + b_proj


if __name__ == "__main__":
    # Small shapes consistent with the module's forward: (batch, seq, dim)
    B, N, dim, num_heads = 2, 8, 32, 4          # head_dim = 8
    key = jax.random.PRNGKey(0)
    kx, kq, kp = jax.random.split(key, 3)

    x = jax.random.normal(kx, (B, N, dim), dtype=jnp.float32)
    # nn.Linear weights in (in_features, out_features) layout; trunc_normal(std=0.02),
    # qkv_bias=False (zeros == no bias), proj bias zero-init.
    w_qkv = jax.random.truncated_normal(kq, -2.0, 2.0, (dim, 3 * dim), jnp.float32) * 0.02
    b_qkv = jnp.zeros((3 * dim,), jnp.float32)
    w_proj = jax.random.truncated_normal(kp, -2.0, 2.0, (dim, dim), jnp.float32) * 0.02
    b_proj = jnp.zeros((dim,), jnp.float32)

    with jax.default_matmul_precision("highest"):
        ref = attention_ref(x, w_qkv, b_qkv, w_proj, b_proj, num_heads)

    # Default (bf16 MXU operands, f32 accumulation / softmax) path.
    out = attention_forward(x, w_qkv, b_qkv, w_proj, b_proj, num_heads)
    out = jax.block_until_ready(out)
    assert out.shape == (B, N, dim) and out.dtype == x.dtype
    assert jnp.allclose(out, ref, atol=5e-3, rtol=5e-2), (
        f"bf16 path mismatch vs reference (max abs err {jnp.max(jnp.abs(out - ref))})")

    # Full-f32 path sanity check of the kernel logic (tiling, masking, softmax).
    out32 = attention_forward(x, w_qkv, b_qkv, w_proj, b_proj, num_heads,
                              compute_dtype=jnp.float32)
    out32 = jax.block_until_ready(out32)
    assert jnp.allclose(out32, ref, atol=1e-3, rtol=1e-2), (
        f"f32 path mismatch vs reference (max abs err {jnp.max(jnp.abs(out32 - ref))})")

    print("KERNEL_OK")
</pallas_src>

<mosaic_0001>
module attributes {stable_mosaic.version = 11 : i64} {
  func.func @_matmul_bias_kernel(%arg0: i32, %arg1: i32, %arg2: i32, %arg3: memref<16x128xbf16, #tpu.memory_space<vmem>>, %arg4: memref<128x128xbf16, #tpu.memory_space<vmem>>, %arg5: memref<1x128xf32, #tpu.memory_space<vmem>>, %arg6: memref<16x128xbf16, #tpu.memory_space<vmem>>, %arg7: memref<16x128xf32, #tpu.memory_space<vmem>>) attributes {dimension_semantics = [#tpu.dimension_semantics<parallel>, #tpu.dimension_semantics<parallel>, #tpu.dimension_semantics<arbitrary>], iteration_bounds = array<i64: 1, 1, 1>, scalar_prefetch = 0 : i64, scratch_operands = 1 : i64, tpu.core_type = #tpu.core_type<tc>, window_params = [{transform_indices = @transform_0, window_bounds = array<i64: 16, 128>}, {transform_indices = @transform_1, window_bounds = array<i64: 128, 128>}, {transform_indices = @transform_2, window_bounds = array<i64: 1, 128>}, {transform_indices = @transform_3, window_bounds = array<i64: 16, 128>}]} {
    %c0_i32 = arith.constant 0 : i32
    %0 = arith.cmpi eq, %arg2, %c0_i32 : i32
    %1 = arith.extui %0 : i1 to i32
    %c0_i32_0 = arith.constant 0 : i32
    %2 = arith.cmpi ne, %1, %c0_i32_0 : i32
    scf.if %2 {
      %cst_10 = arith.constant 0.000000e+00 : f32
      %12 = vector.broadcast %cst_10 : f32 to vector<16x128xf32>
      %c0_11 = arith.constant 0 : index
      %c0_12 = arith.constant 0 : index
      %13 = vector.load %arg7[%c0_11, %c0_12] : memref<16x128xf32, #tpu.memory_space<vmem>>, vector<16x128xf32>
      tpu.vector_store %arg7[%c0_11, %c0_12], %12 {strides = array<i32>} : memref<16x128xf32, #tpu.memory_space<vmem>>, vector<16x128xf32>,
    } else {
    }
    %c0 = arith.constant 0 : index
    %c0_1 = arith.constant 0 : index
    %3 = vector.load %arg7[%c0, %c0_1] : memref<16x128xf32, #tpu.memory_space<vmem>>, vector<16x128xf32>
    %c0_2 = arith.constant 0 : index
    %c0_3 = arith.constant 0 : index
    %4 = vector.load %arg3[%c0_2, %c0_3] : memref<16x128xbf16, #tpu.memory_space<vmem>>, vector<16x128xbf16>
    %c0_4 = arith.constant 0 : index
    %c0_5 = arith.constant 0 : index
    %5 = vector.load %arg4[%c0_4, %c0_5] : memref<128x128xbf16, #tpu.memory_space<vmem>>, vector<128x128xbf16>
    %cst = arith.constant dense<0.000000e+00> : vector<16x128xf32>
    %6 = tpu.matmul %4, %5, %cst {dimension_numbers = #tpu.dot_dimension_numbers<[1], [0], [0], [1], [0, 0, 1, 1], [], []>} : vector<16x128xbf16>, vector<128x128xbf16>, vector<16x128xf32> -> vector<16x128xf32>
    %7 = arith.addf %3, %6 : vector<16x128xf32>
    %c0_6 = arith.constant 0 : index
    %c0_7 = arith.constant 0 : index
    %8 = vector.load %arg7[%c0_6, %c0_7] : memref<16x128xf32, #tpu.memory_space<vmem>>, vector<16x128xf32>
    tpu.vector_store %arg7[%c0_6, %c0_7], %7 {strides = array<i32>} : memref<16x128xf32, #tpu.memory_space<vmem>>, vector<16x128xf32>,
    %c0_i32_8 = arith.constant 0 : i32
    %9 = arith.cmpi eq, %arg2, %c0_i32_8 : i32
    %10 = arith.extui %9 : i1 to i32
    %c0_i32_9 = arith.constant 0 : i32
    %11 = arith.cmpi ne, %10, %c0_i32_9 : i32
    scf.if %11 {
      %c0_10 = arith.constant 0 : index
      %c0_11 = arith.constant 0 : index
      %12 = vector.load %arg7[%c0_10, %c0_11] : memref<16x128xf32, #tpu.memory_space<vmem>>, vector<16x128xf32>
      %c0_12 = arith.constant 0 : index
      %c0_13 = arith.constant 0 : index
      %13 = vector.load %arg5[%c0_12, %c0_13] : memref<1x128xf32, #tpu.memory_space<vmem>>, vector<1x128xf32>
      %14 = vector.broadcast %13 : vector<1x128xf32> to vector<16x128xf32>
      %15 = arith.addf %12, %14 : vector<16x128xf32>
      %16 = arith.truncf %15 : vector<16x128xf32> to vector<16x128xbf16>
      %c0_14 = arith.constant 0 : index
      %c0_15 = arith.constant 0 : index
      %17 = vector.load %arg6[%c0_14, %c0_15] : memref<16x128xbf16, #tpu.memory_space<vmem>>, vector<16x128xbf16>
      tpu.vector_store %arg6[%c0_14, %c0_15], %16 {strides = array<i32>} : memref<16x128xbf16, #tpu.memory_space<vmem>>, vector<16x128xbf16>,
    } else {
    }
    return
  }
  func.func @transform_0(%arg0: i32, %arg1: i32, %arg2: i32) -> (i32, i32) {
    %c0_i32 = arith.constant 0 : i32
    return %arg0, %arg2 : i32, i32
  }
  func.func @transform_1(%arg0: i32, %arg1: i32, %arg2: i32) -> (i32, i32) {
    %c0_i32 = arith.constant 0 : i32
    return %arg2, %arg1 : i32, i32
  }
  func.func @transform_2(%arg0: i32, %arg1: i32, %arg2: i32) -> (i32, i32) {
    %c0_i32 = arith.constant 0 : i32
    %c0_i32_0 = arith.constant 0 : i32
    return %c0_i32, %arg1 : i32, i32
  }
  func.func @transform_3(%arg0: i32, %arg1: i32, %arg2: i32) -> (i32, i32) {
    %c0_i32 = arith.constant 0 : i32
    return %arg0, %arg1 : i32, i32
  }
}

</mosaic_0001>

<llo_original>
// kernel: tpu_custom_call.1
$region0: #{tpu_custom_call.1}
  #allocation0 [shape = 'u32[]', space=smem, size = 0x4, offset = 0x4, fixed_abs, tag = 'smem constant byte address 0x4 - core index']
  #allocation1 [shape = 'u32[72,128]{1,0:T(1,128)}', space=vmem, size = 0x9000, scoped, tag = 'internal scratch']
  #allocation2 [shape = 'f32[16,128]{1,0:T(8,128)}', space=vmem, size = 0x2000, scoped, tag = 'scratch operand']
  %s0 = inlined_call_operand.hbm [shape: bf16[16,128], index: 0, kind: input, shape index: {}]
  %s1 = inlined_call_operand.hbm [shape: bf16[128,128], index: 1, kind: input, shape index: {}]
  %s2 = inlined_call_operand.vmem [shape: f32[1,128], index: 2, kind: input, shape index: {}]
  %s3 = inlined_call_operand.hbm [shape: bf16[16,128], index: 3, kind: output, shape index: {}]
  %s4 = sld [smem:[#allocation0]]
  $region38: #{tpu_custom_call.1} parent=0
    _
  %s6 = ssub.s32 1, %s4
  %s7 = scalar_select 0, %s6, %s4
  $region1: #{tpu_custom_call.1} parent=0
    #allocation3 [shape = 'u8[4096]{0}', space=vmem, size = 0x1000, scoped, tag = 'input window, operand 0, single buffered']
    #allocation4 [shape = 's32[1]{0}', space=sflag, size = 0x4, scoped, tag = 'scoped memory for tpu_custom_call.1']
    #allocation5 [shape = 's32[1]{0}', space=sflag, size = 0x4, scoped, tag = 'scoped memory for tpu_custom_call.1']
    #allocation6 [shape = 'u8[32768]{0}', space=vmem, size = 0x8000, scoped, tag = 'input window, operand 1, single buffered']
    #allocation7 [shape = 's32[1]{0}', space=sflag, size = 0x4, scoped, tag = 'scoped memory for tpu_custom_call.1']
    #allocation8 [shape = 'u8[4096]{0}', space=vmem, size = 0x1000, scoped, tag = 'output window, operand 0, single buffered']
    %8 = vsyncpa [#allocation4], 0
    %9 = vsyncpa [#allocation7], 0
    %10 = vsyncpa [#allocation5], 0
    // Predicated region
    $region2: #{tpu_custom_call.1} parent=1 // pred_check
      _
    $region3: #{tpu_custom_call.1} parent=1 // pred_check_branch
      %12 = sbr.rel (0) target = $region5
    $region4: #{tpu_custom_call.1} parent=1 // pred_region
      %14 = vsyncadd [#allocation4], 0
      %s15 = sshll.u32 %s0, 4
      %s16 = int_to_ptr.hbm [resolvable:$true] %s15
      %s17 = sshll.u32 [#allocation3], 4
      %s18 = int_to_ptr.vmem [resolvable:$true] %s17
      %23 = dma.hbm_to_vmem [thread:$0]  %s16, 128, %s18, [#allocation4], 64, 64, 4
    $region5: #{tpu_custom_call.1} parent=1 // pred_fallthru
      _
    // Predicated region
    $region6: #{tpu_custom_call.1} parent=1 // pred_check
      _
    $region7: #{tpu_custom_call.1} parent=1 // pred_check_branch
      %25 = sbr.rel (0) target = $region9
    $region8: #{tpu_custom_call.1} parent=1 // pred_region
      %27 = vsyncadd [#allocation7], 0
      %s28 = sshll.u32 %s1, 4
      %s29 = int_to_ptr.hbm [resolvable:$true] %s28
      %s30 = sshll.u32 [#allocation6], 4
      %s31 = int_to_ptr.vmem [resolvable:$true] %s30
      %36 = dma.hbm_to_vmem [thread:$0]  %s29, 1024, %s31, [#allocation7], 64, 64, 4
    $region9: #{tpu_custom_call.1} parent=1 // pred_fallthru
      _
    // Predicated region
    $region10: #{tpu_custom_call.1} parent=1 // pred_check
      _
    $region11: #{tpu_custom_call.1} parent=1 // pred_check_branch
      %38 = sbr.rel (0) target = $region13
    $region12: #{tpu_custom_call.1} parent=1 // pred_region
      _
    $region13: #{tpu_custom_call.1} parent=1 // pred_fallthru
      _
    // Predicated region
    $region14: #{tpu_custom_call.1} parent=1 // pred_check
      _
    $region15: #{tpu_custom_call.1} parent=1 // pred_check_branch
      %40 = sbr.rel (0) target = $region17
    $region16: #{tpu_custom_call.1} parent=1 // pred_region
      %42 = dma.done [#allocation4], 128
    $region17: #{tpu_custom_call.1} parent=1 // pred_fallthru
      _
    // Predicated region
    $region18: #{tpu_custom_call.1} parent=1 // pred_check
      _
    $region19: #{tpu_custom_call.1} parent=1 // pred_check_branch
      %44 = sbr.rel (0) target = $region21
    $region20: #{tpu_custom_call.1} parent=1 // pred_region
      %46 = dma.done [#allocation7], 1024
    $region21: #{tpu_custom_call.1} parent=1 // pred_fallthru
      _
    %p47 = scmp.eq.s32.totalorder 0, 0
    // Predicated region
    $region22: #{tpu_custom_call.1} parent=1 // pred_check
      %p48 = pneg %p47
    $region23: #{tpu_custom_call.1} parent=1 // pred_check_branch
      %50 = sbr.rel (%p48) target = $region25
    $region24: #{tpu_custom_call.1} parent=1 // pred_region
      %51 = vst [vmem:[#allocation2] sm:$0xff] 0.0
      %52 = vst [vmem:[#allocation2 + $0x8] sm:$0xff] 0.0
    $region25: #{tpu_custom_call.1} parent=1 // pred_fallthru
      _
    %v53 = vld [vmem:[#allocation2] sm:$0xff]
    %v54 = vld [vmem:[#allocation2 + $0x8] sm:$0xff]
    %v55 = vld [vmem:[#allocation3] sm:$0xf]
    %v56 = vld [vmem:[#allocation3 + $0x4] sm:$0xf]
    %v57 = vld [vmem:[#allocation6] sm:$0xf]
    %v58 = vld [vmem:[#allocation6 + $0x4] sm:$0xf]
    %v59 = vld [vmem:[#allocation6 + $0x8] sm:$0xf]
    %v60 = vld [vmem:[#allocation6 + $0xc] sm:$0xf]
    %v61 = vld [vmem:[#allocation6 + $0x10] sm:$0xf]
    %v62 = vld [vmem:[#allocation6 + $0x14] sm:$0xf]
    %v63 = vld [vmem:[#allocation6 + $0x18] sm:$0xf]
    %v64 = vld [vmem:[#allocation6 + $0x1c] sm:$0xf]
    %v65 = vld [vmem:[#allocation6 + $0x20] sm:$0xf]
    %v66 = vld [vmem:[#allocation6 + $0x24] sm:$0xf]
    %v67 = vld [vmem:[#allocation6 + $0x28] sm:$0xf]
    %v68 = vld [vmem:[#allocation6 + $0x2c] sm:$0xf]
    %v69 = vld [vmem:[#allocation6 + $0x30] sm:$0xf]
    %v70 = vld [vmem:[#allocation6 + $0x34] sm:$0xf]
    %v71 = vld [vmem:[#allocation6 + $0x38] sm:$0xf]
    %v72 = vld [vmem:[#allocation6 + $0x3c] sm:$0xf]
    %v75 = vunpack.c.l.b16 %v55
    %v76 = vunpack.c.l.b16 %v56
    %v77 = vpack.c.b16 %v76, %v75
    %v95 = vunpack.c.l.b16 %v57
    %v96 = vunpack.c.l.b16 %v58
    %v97 = vunpack.c.l.b16 %v59
    %v98 = vunpack.c.l.b16 %v60
    %v99 = vunpack.c.l.b16 %v61
    %v100 = vunpack.c.l.b16 %v62
    %v101 = vunpack.c.l.b16 %v63
    %v102 = vunpack.c.l.b16 %v64
    %v103 = vunpack.c.l.b16 %v65
    %v104 = vunpack.c.l.b16 %v66
    %v105 = vunpack.c.l.b16 %v67
    %v106 = vunpack.c.l.b16 %v68
    %v107 = vunpack.c.l.b16 %v69
    %v108 = vunpack.c.l.b16 %v70
    %v109 = vunpack.c.l.b16 %v71
    %v110 = vunpack.c.l.b16 %v72
    %v111 = vpack.c.b16 %v96, %v95
    %v112 = vpack.c.b16 %v98, %v97
    %v113 = vpack.c.b16 %v100, %v99
    %v114 = vpack.c.b16 %v102, %v101
    %v115 = vpack.c.b16 %v104, %v103
    %v116 = vpack.c.b16 %v106, %v105
    %v117 = vpack.c.b16 %v108, %v107
    %v118 = vpack.c.b16 %v110, %v109
    %127 = vmatpush.bf16.msra.mxu0 %v118
    %128 = vmatpush.bf16.msra.mxu0 %v117
    %129 = vmatpush.bf16.msra.mxu0 %v116
    %130 = vmatpush.bf16.msra.mxu0 %v115
    %131 = vmatpush.bf16.msra.mxu0 %v114
    %132 = vmatpush.bf16.msra.mxu0 %v113
    %133 = vmatpush.bf16.msra.mxu0 %v112
    %134 = vmatpush.bf16.msra.mxu0 %v111
    %135 = vmatmul.bf16.gmra.mxu0 %v77
    %v136 = vpop.f32.mrf.mxu0
    %v137 = vadd.f32 0.0, %v136
    %v138 = vpop.f32.mrf.mxu0
    %v139 = vadd.f32 0.0, %v138
    %140 = vdwg.mxu0
    %v141 = vadd.f32 %v53, %v137
    %v142 = vadd.f32 %v54, %v139
    %143 = vst [vmem:[#allocation2] sm:$0xff] %v141
    %144 = vst [vmem:[#allocation2 + $0x8] sm:$0xff] %v142
    // Predicated region
    $region26: #{tpu_custom_call.1} parent=1 // pred_check
      %p145 = pneg %p47
    $region27: #{tpu_custom_call.1} parent=1 // pred_check_branch
      %147 = sbr.rel (%p145) target = $region29
    $region28: #{tpu_custom_call.1} parent=1 // pred_region
      %v148 = vld [vmem:[#allocation2] sm:$0xff]
      %v149 = vld [vmem:[#allocation2 + $0x8] sm:$0xff]
      %v150 = vld [vmem:[%s2] sm:$0x1]
      %v152 = vperm.slane %v150, 0
      %v154 = vadd.f32 %v148, %v152
      %v155 = vadd.f32 %v149, %v152
      %v156 = vpack.c.bf16 %v154, %v154
      %v157 = vpack.c.bf16 %v155, %v155
      %158 = vst [vmem:[#allocation8] sm:$0xf] %v156
      %159 = vst [vmem:[#allocation8 + $0x4] sm:$0xf] %v157
    $region29: #{tpu_custom_call.1} parent=1 // pred_fallthru
      _
    // Predicated region
    $region30: #{tpu_custom_call.1} parent=1 // pred_check
      _
    $region31: #{tpu_custom_call.1} parent=1 // pred_check_branch
      %161 = sbr.rel (0) target = $region33
    $region32: #{tpu_custom_call.1} parent=1 // pred_region
      %163 = vsyncadd [#allocation5], 0
      %s164 = sshll.u32 [#allocation8], 4
      %s165 = int_to_ptr.vmem [resolvable:$true] %s164
      %s166 = sshll.u32 %s3, 4
      %s167 = int_to_ptr.hbm [resolvable:$true] %s166
      %172 = dma.vmem_to_hbm [thread:$0]  %s165, 128, %s167, [#allocation5], 64, 64, 4
    $region33: #{tpu_custom_call.1} parent=1 // pred_fallthru
      _
    // Predicated region
    $region34: #{tpu_custom_call.1} parent=1 // pred_check
      _
    $region35: #{tpu_custom_call.1} parent=1 // pred_check_branch
      %174 = sbr.rel (0) target = $region37
    $region36: #{tpu_custom_call.1} parent=1 // pred_region
      %176 = dma.done [#allocation5], 128
    $region37: #{tpu_custom_call.1} parent=1 // pred_fallthru
      _
    %177 = vsyncpa [#allocation4], 1
    %178 = vsyncpa [#allocation7], 1
    %179 = vsyncpa [#allocation5], 1

</llo_original>
